<compile_context>
chip_gen: v5e
topology: v5e:2x2
jax: 0.10.0
libtpu: 0.0.40
codegen_flags: <defaults>
</compile_context>

<pallas_src>
import functools

import jax
import jax.numpy as jnp
from jax.experimental import pallas as pl
from jax.experimental.pallas import tpu as pltpu


def _round_up(n: int, m: int) -> int:
    return (n + m - 1) // m * m


def _patch_embed_kernel(p_ref, w_ref, b_ref, o_ref):
    # (TM, K) bf16 @ (K, TN) bf16 -> f32 accumulate on the MXU.
    acc = jnp.dot(p_ref[...], w_ref[...], preferred_element_type=jnp.float32)
    # Bias add in f32 (v5e has no bf16 VPU), then cast to output dtype.
    o_ref[...] = (acc + b_ref[...]).astype(o_ref.dtype)


@functools.partial(jax.jit, static_argnames=("patch_size", "tile_m", "tile_n"))
def patch_embeddings(x, conv_weight, conv_bias, *, patch_size,
                     tile_m=512, tile_n=1024):
    """x: (B, D, H, W) float32
       conv_weight: (d_model, 1, p, p, p)   (PyTorch Conv3d layout)
       conv_bias:   (d_model,)
       returns: (B, Nd*Nh*Nw, d_model) float32
    """
    B, D, H, W = x.shape
    p = patch_size
    d_model = conv_weight.shape[0]
    if D % p or H % p or W % p:
        raise ValueError(
            "spatial dims must be divisible by patch_size (stride-p Conv3d "
            "drops trailing voxels otherwise)")
    Nd, Nh, Nw = D // p, H // p, W // p
    n_patches = Nd * Nh * Nw
    M = B * n_patches
    K = p * p * p

    # Lane-dense feature dim: pad d_model up to a multiple of 128 if needed.
    Dp = _round_up(d_model, 128)
    pad_n = Dp - d_model

    # --- patch extraction (XLA data formatting; bf16 cast fused in) ----------
    # TODO(synk): fuse extraction into the kernel (manual slab DMA over
    # (b, id, ih) with in-VMEM re-layout) to eliminate this extra HBM pass.
    xp = x.reshape(B, Nd, p, Nh, p, Nw, p).transpose(0, 1, 3, 5, 2, 4, 6)
    patches = xp.reshape(M, K).astype(jnp.bfloat16)                    # (M, K)

    # Conv3d weight (d_model, 1, p, p, p) -> (K, d_model) [-> pad] -> bf16.
    w2d = conv_weight.reshape(d_model, K).T.astype(jnp.bfloat16)       # (K, d_model)
    b2d = conv_bias.astype(jnp.float32).reshape(1, d_model)            # (1, d_model)
    if pad_n:
        w2d = jnp.pad(w2d, ((0, 0), (0, pad_n)))
        b2d = jnp.pad(b2d, ((0, 0), (0, pad_n)))

    # --- tiling --------------------------------------------------------------
    TM = tile_m if M > tile_m else M            # mult-of-8 or == full M
    TN = tile_n if Dp > tile_n else Dp          # mult-of-128
    grid = (pl.cdiv(M, TM), pl.cdiv(Dp, TN))

    # VMEM budget: double-buffered patch/weight/bias/output tiles.
    est_bytes = (2 * TM * K * 2      # patches tiles (bf16)
                 + 2 * K * TN * 2    # weight tiles (bf16)
                 + 2 * TN * 4        # bias tiles (f32)
                 + 2 * TM * TN * 4)  # output tiles (f32)
    vmem_limit = int(min(64 * 1024 * 1024, max(32 * 1024 * 1024, 2 * est_bytes)))

    cost = pl.CostEstimate(
        flops=2 * M * K * Dp,
        transcendentals=0,
        bytes_accessed=M * K * 2 + K * Dp * 2 + Dp * 4 + M * Dp * 4,
    )

    out2d = pl.pallas_call(
        _patch_embed_kernel,
        out_shape=jax.ShapeDtypeStruct((M, Dp), x.dtype),
        grid=grid,
        in_specs=[
            pl.BlockSpec((TM, K), lambda i, j: (i, 0)),   # patches: tiled over M
            pl.BlockSpec((K, TN), lambda i, j: (0, j)),   # weight: tiled over N
            pl.BlockSpec((1, TN), lambda i, j: (0, j)),   # bias:   tiled over N
        ],
        out_specs=pl.BlockSpec((TM, TN), lambda i, j: (i, j)),
        compiler_params=pltpu.CompilerParams(
            dimension_semantics=("parallel", "parallel"),
            vmem_limit_bytes=vmem_limit,
            allow_input_fusion=[True, False, False],
        ),
        cost_estimate=cost,
    )(patches, w2d, b2d)

    if pad_n:
        out2d = out2d[:, :d_model]
    return out2d.reshape(B, n_patches, d_model)


if __name__ == "__main__":
    # Small shapes consistent with the module's forward pass.
    B, D, H, W = 2, 8, 8, 8
    patch_size = 4
    d_model = 32

    key = jax.random.PRNGKey(0)
    kx, kw, kb = jax.random.split(key, 3)

    x = jax.random.normal(kx, (B, D, H, W), dtype=jnp.float32)
    # Deterministic parameter init (shapes match nn.Conv3d(1, d_model, p, p, p)).
    conv_weight = jax.random.normal(
        kw, (d_model, 1, patch_size, patch_size, patch_size), dtype=jnp.float32
    ) * 0.02
    conv_bias = jax.random.normal(kb, (d_model,), dtype=jnp.float32) * 0.02

    out = patch_embeddings(x, conv_weight, conv_bias, patch_size=patch_size)
    out = jax.block_until_ready(out)

    # Reference check in plain JAX f32 (same patch extraction + matmul math).
    p = patch_size
    Nd, Nh, Nw = D // p, H // p, W // p
    xp = x.reshape(B, Nd, p, Nh, p, Nw, p).transpose(0, 1, 3, 5, 2, 4, 6)
    patches_ref = xp.reshape(B, Nd * Nh * Nw, p * p * p)
    ref = patches_ref @ conv_weight.reshape(d_model, -1).T + conv_bias[None, None, :]

    assert out.shape == (B, Nd * Nh * Nw, d_model), out.shape
    # bf16 operands (f32 accumulation) -> loosened tolerance vs f32 reference.
    assert jnp.allclose(out, ref, atol=1e-2, rtol=1e-2)

    print("KERNEL_OK")
</pallas_src>

<mosaic_0001>
module attributes {stable_mosaic.version = 11 : i64} {
  func.func @_patch_embed_kernel(%arg0: i32, %arg1: i32, %arg2: memref<16x64xbf16, #tpu.memory_space<vmem>>, %arg3: memref<64x128xbf16, #tpu.memory_space<vmem>>, %arg4: memref<1x128xf32, #tpu.memory_space<vmem>>, %arg5: memref<16x128xf32, #tpu.memory_space<vmem>>) attributes {dimension_semantics = [#tpu.dimension_semantics<parallel>, #tpu.dimension_semantics<parallel>], iteration_bounds = array<i64: 1, 1>, scalar_prefetch = 0 : i64, scratch_operands = 0 : i64, tpu.core_type = #tpu.core_type<tc>, window_params = [{transform_indices = @transform_0, window_bounds = array<i64: 16, 64>}, {transform_indices = @transform_1, window_bounds = array<i64: 64, 128>}, {transform_indices = @transform_2, window_bounds = array<i64: 1, 128>}, {transform_indices = @transform_3, window_bounds = array<i64: 16, 128>}]} {
    %c0 = arith.constant 0 : index
    %c0_0 = arith.constant 0 : index
    %0 = vector.load %arg2[%c0, %c0_0] : memref<16x64xbf16, #tpu.memory_space<vmem>>, vector<16x64xbf16>
    %c0_1 = arith.constant 0 : index
    %c0_2 = arith.constant 0 : index
    %1 = vector.load %arg3[%c0_1, %c0_2] : memref<64x128xbf16, #tpu.memory_space<vmem>>, vector<64x128xbf16>
    %cst = arith.constant dense<0.000000e+00> : vector<16x128xf32>
    %2 = tpu.matmul %0, %1, %cst {dimension_numbers = #tpu.dot_dimension_numbers<[1], [0], [0], [1], [0, 0, 1, 1], [], []>} : vector<16x64xbf16>, vector<64x128xbf16>, vector<16x128xf32> -> vector<16x128xf32>
    %c0_3 = arith.constant 0 : index
    %c0_4 = arith.constant 0 : index
    %3 = vector.load %arg4[%c0_3, %c0_4] : memref<1x128xf32, #tpu.memory_space<vmem>>, vector<1x128xf32>
    %4 = vector.broadcast %3 : vector<1x128xf32> to vector<16x128xf32>
    %5 = arith.addf %2, %4 : vector<16x128xf32>
    %c0_5 = arith.constant 0 : index
    %c0_6 = arith.constant 0 : index
    %6 = vector.load %arg5[%c0_5, %c0_6] : memref<16x128xf32, #tpu.memory_space<vmem>>, vector<16x128xf32>
    tpu.vector_store %arg5[%c0_5, %c0_6], %5 {strides = array<i32>} : memref<16x128xf32, #tpu.memory_space<vmem>>, vector<16x128xf32>,
    return
  }
  func.func @transform_0(%arg0: i32, %arg1: i32) -> (i32, i32) {
    %c0_i32 = arith.constant 0 : i32
    %c0_i32_0 = arith.constant 0 : i32
    return %arg0, %c0_i32 : i32, i32
  }
  func.func @transform_1(%arg0: i32, %arg1: i32) -> (i32, i32) {
    %c0_i32 = arith.constant 0 : i32
    %c0_i32_0 = arith.constant 0 : i32
    return %c0_i32, %arg1 : i32, i32
  }
  func.func @transform_2(%arg0: i32, %arg1: i32) -> (i32, i32) {
    %c0_i32 = arith.constant 0 : i32
    %c0_i32_0 = arith.constant 0 : i32
    return %c0_i32, %arg1 : i32, i32
  }
  func.func @transform_3(%arg0: i32, %arg1: i32) -> (i32, i32) {
    %c0_i32 = arith.constant 0 : i32
    return %arg0, %arg1 : i32, i32
  }
}

</mosaic_0001>

<llo_original>
// kernel: patch_embeddings.1
$region0: #{patch_embeddings.1}
  #allocation0 [shape = 'u32[]', space=smem, size = 0x4, offset = 0x4, fixed_abs, tag = 'smem constant byte address 0x4 - core index']
  #allocation1 [shape = 'u32[72,128]{1,0:T(1,128)}', space=vmem, size = 0x9000, scoped, tag = 'internal scratch']
  %s0 = inlined_call_operand.vmem [shape: bf16[16,64], index: 0, kind: input, shape index: {}]
  %s1 = inlined_call_operand.vmem [shape: bf16[64,128], index: 1, kind: input, shape index: {}]
  %s2 = inlined_call_operand.vmem [shape: f32[1,128], index: 2, kind: input, shape index: {}]
  %s3 = inlined_call_operand.vmem [shape: f32[16,128], index: 3, kind: output, shape index: {}]
  %s4 = sld [smem:[#allocation0]]
  $region22: #{patch_embeddings.1} parent=0
    _
  %s6 = ssub.s32 1, %s4
  %s7 = scalar_select 0, %s6, %s4
  // Predicated region
  $region2: #{patch_embeddings.1} parent=0 // pred_check
    _
  $region3: #{patch_embeddings.1} parent=0 // pred_check_branch
    %9 = sbr.rel (0) target = $region5
  $region4: #{patch_embeddings.1} parent=0 // pred_region
    _
  $region5: #{patch_embeddings.1} parent=0 // pred_fallthru
    _
  // Predicated region
  $region6: #{patch_embeddings.1} parent=0 // pred_check
    _
  $region7: #{patch_embeddings.1} parent=0 // pred_check_branch
    %11 = sbr.rel (0) target = $region9
  $region8: #{patch_embeddings.1} parent=0 // pred_region
    _
  $region9: #{patch_embeddings.1} parent=0 // pred_fallthru
    _
  // Predicated region
  $region10: #{patch_embeddings.1} parent=0 // pred_check
    _
  $region11: #{patch_embeddings.1} parent=0 // pred_check_branch
    %13 = sbr.rel (0) target = $region13
  $region12: #{patch_embeddings.1} parent=0 // pred_region
    _
  $region13: #{patch_embeddings.1} parent=0 // pred_fallthru
    _
  %v15 = vld [vmem:[%s0] sm:$0xf]
  %v16 = vld [vmem:[%s0 + $0x4] sm:$0xf]
  %v17 = vld [vmem:[%s1] sm:$0xf]
  %v18 = vld [vmem:[%s1 + $0x4] sm:$0xf]
  %v19 = vld [vmem:[%s1 + $0x8] sm:$0xf]
  %v20 = vld [vmem:[%s1 + $0xc] sm:$0xf]
  %v21 = vld [vmem:[%s1 + $0x10] sm:$0xf]
  %v22 = vld [vmem:[%s1 + $0x14] sm:$0xf]
  %v23 = vld [vmem:[%s1 + $0x18] sm:$0xf]
  %v24 = vld [vmem:[%s1 + $0x1c] sm:$0xf]
  %v25 = vld [vmem:[%s2] sm:$0x1]
  %v27 = vperm.slane %v25, 0
  %v31 = vunpack.c.l.b16 %v15
  %v32 = vunpack.c.l.b16 %v16
  %v33 = vpack.c.b16 %v32, %v31
  %v42 = vunpack.c.l.b16 %v17
  %v43 = vunpack.c.l.b16 %v18
  %v44 = vunpack.c.l.b16 %v19
  %v45 = vunpack.c.l.b16 %v20
  %v46 = vunpack.c.l.b16 %v21
  %v47 = vunpack.c.l.b16 %v22
  %v48 = vunpack.c.l.b16 %v23
  %v49 = vunpack.c.l.b16 %v24
  %v50 = vpack.c.b16 %v43, %v42
  %v51 = vpack.c.b16 %v45, %v44
  %v52 = vpack.c.b16 %v47, %v46
  %v53 = vpack.c.b16 %v49, %v48
  %vm58 = vcmask 523264
  %v60 = vsel %vm58, %v33, 0
  %62 = vmatpush.bf16.msra.mxu0 0
  %63 = vmatpush.bf16.msra.mxu0 0
  %64 = vmatpush.bf16.msra.mxu0 0
  %65 = vmatpush.bf16.msra.mxu0 0
  %66 = vmatpush.bf16.msra.mxu0 %v53
  %67 = vmatpush.bf16.msra.mxu0 %v52
  %68 = vmatpush.bf16.msra.mxu0 %v51
  %69 = vmatpush.bf16.msra.mxu0 %v50
  %70 = vmatmul.bf16.gmra.mxu0 %v60
  %v71 = vpop.f32.mrf.mxu0
  %v72 = vadd.f32 %v27, %v71
  %v73 = vpop.f32.mrf.mxu0
  %v74 = vadd.f32 %v27, %v73
  %75 = vdwg.mxu0
  %76 = vst [vmem:[%s3] sm:$0xff] %v72
  %77 = vst [vmem:[%s3 + $0x8] sm:$0xff] %v74
  // Predicated region
  $region14: #{patch_embeddings.1} parent=0 // pred_check
    _
  $region15: #{patch_embeddings.1} parent=0 // pred_check_branch
    %79 = sbr.rel (0) target = $region17
  $region16: #{patch_embeddings.1} parent=0 // pred_region
    _
  $region17: #{patch_embeddings.1} parent=0 // pred_fallthru
    _
  // Predicated region
  $region18: #{patch_embeddings.1} parent=0 // pred_check
    _
  $region19: #{patch_embeddings.1} parent=0 // pred_check_branch
    %81 = sbr.rel (0) target = $region21
  $region20: #{patch_embeddings.1} parent=0 // pred_region
    _
  $region21: #{patch_embeddings.1} parent=0 // pred_fallthru
    _

</llo_original>
